<compile_context>
chip_gen: v7x
topology: tpu7x:2x2x1
jax: 0.10.0
libtpu: 0.0.40
codegen_flags: <defaults>
</compile_context>

<pallas_src>
import functools
import math

import jax
import jax.numpy as jnp
from jax.experimental import pallas as pl
from jax.experimental.pallas import tpu as pltpu

_LANE = 128


def _round_up(x: int, m: int) -> int:
    return ((x + m - 1) // m) * m


# ----------------------------------------------------------------------------
# Pallas kernel: fused broadcast linear  out = x * w + b   (K == 1 Linear)
# ----------------------------------------------------------------------------
def _category_layer_kernel(x_ref, w_ref, b_ref, o_ref):
    """x_ref: (tr, 128)      lane-dense tile of the flattened input
       w_ref: (1, C)         Linear weight, reshaped from PyTorch's (C, 1)
       b_ref: (1, C)         Linear bias
       o_ref: (tr, 128, C)   output tile
    """
    x = x_ref[...]                                   # (tr, 128) f32
    w = w_ref[...]                                   # (1, C) -> broadcasts as (1, 1, C)
    b = b_ref[...]                                   # (1, C)
    o_ref[...] = (x[:, :, None] * w + b).astype(o_ref.dtype)   # VPU broadcast FMA


# ----------------------------------------------------------------------------
# Wrapper: flatten leading dims, lane-dense layout, tile rows, call the kernel
# ----------------------------------------------------------------------------
def category_layer_forward(params, x, *, out_dtype=jnp.float32,
                           tr_max: int = 64, target_steps: int = 8):
    """params: {"w": (C, 1), "b": (C,)} in PyTorch nn.Linear layout.
       x: (..., 1) float input.  Returns (..., C) in out_dtype."""
    w_t = params["w"]
    b = params["b"]
    c = w_t.shape[0]
    assert x.shape[-1] == 1, "CategoryLayer expects last input dim == 1"

    lead = x.shape[:-1]
    m = math.prod(lead) if lead else 1

    # --- lane-dense input: (M,) -> pad to multiple of 128 -> (R, 128) -------
    mp = _round_up(m, _LANE)
    r = mp // _LANE
    x_flat = x.reshape(m).astype(jnp.float32)
    if mp != m:
        x_flat = jnp.pad(x_flat, (0, mp - m))        # pads only M*4 B of input
    x2 = x_flat.reshape(r, _LANE)

    w_row = w_t.reshape(1, c).astype(jnp.float32)
    b_row = b.reshape(1, c).astype(jnp.float32)

    # --- row-group tile: tr groups of 128 rows per grid step -----------------
    # Aim for ~`target_steps` grid steps (v7x has 2 TCs on the "parallel" axis),
    # cap at tr_max (64 -> 8192 rows, ~3 MiB output block), keep tr a multiple
    # of 8 (sublane constraint on the 2-D input block) or equal to the full R.
    tr = _round_up(max(1, pl.cdiv(r, target_steps)), 8)
    tr = min(tr, _round_up(tr_max, 8))
    if tr >= r:
        tr = r                                       # single step; block == full dim
    grid = pl.cdiv(r, tr)                            # partial tail block is masked

    out_bytes = jnp.dtype(out_dtype).itemsize
    cost = pl.CostEstimate(
        flops=2 * m * c,
        transcendentals=0,
        bytes_accessed=m * 4 + m * c * out_bytes + 2 * c * 4,
    )

    out3 = pl.pallas_call(
        _category_layer_kernel,
        out_shape=jax.ShapeDtypeStruct((r, _LANE, c), out_dtype),
        grid=(grid,),
        in_specs=[
            pl.BlockSpec((tr, _LANE), lambda i: (i, 0)),      # lane-dense input rows
            pl.BlockSpec((1, c), lambda i: (0, 0)),           # weight row (resident)
            pl.BlockSpec((1, c), lambda i: (0, 0)),           # bias row (resident)
        ],
        out_specs=pl.BlockSpec((tr, _LANE, c), lambda i: (i, 0, 0)),
        compiler_params=pltpu.CompilerParams(
            dimension_semantics=("parallel",),
        ),
        cost_estimate=cost,
    )(x2, w_row, b_row)

    out = out3.reshape(mp, c)                        # contiguous merge of leading dims
    if mp != m:
        out = out[:m]                                # only when M % 128 != 0
    return out.reshape(*lead, c)


# ----------------------------------------------------------------------------
# Params (PyTorch nn.Linear(1, category_dim) layout) + pure-JAX reference
# ----------------------------------------------------------------------------
def init_category_layer_params(key, category_dim=96):
    k_w, k_b = jax.random.split(key)
    bound = 1.0  # fan_in = 1 -> U(-1, 1), matches nn.Linear's default scale
    w = jax.random.uniform(k_w, (category_dim, 1), jnp.float32, -bound, bound)
    b = jax.random.uniform(k_b, (category_dim,), jnp.float32, -bound, bound)
    return {"w": w, "b": b}


def ref_forward(params, x):
    # nn.Linear: y = x @ W^T + b
    return jnp.einsum("...k,ck->...c", x, params["w"]) + params["b"]


# ----------------------------------------------------------------------------
if __name__ == "__main__":
    # Small shapes consistent with the module: Linear(1, 96) applied to a
    # (batch, seq, 1) input.
    batch, seq, category_dim = 2, 16, 96

    root = jax.random.PRNGKey(0)
    k_params, k_x = jax.random.split(root)
    params = init_category_layer_params(k_params, category_dim)
    x = jax.random.normal(k_x, (batch, seq, 1), jnp.float32)

    fwd = jax.jit(functools.partial(category_layer_forward, params))
    out = jax.block_until_ready(fwd(x))
    assert out.shape == (batch, seq, category_dim), out.shape

    ref = jax.block_until_ready(ref_forward(params, x))
    max_err = float(jnp.max(jnp.abs(out - ref)))
    assert max_err < 1e-5, f"mismatch vs reference: max_err={max_err}"

    print("KERNEL_OK")
</pallas_src>

<mosaic_0001>
module attributes {stable_mosaic.version = 11 : i64} {
  func.func @_category_layer_kernel(%arg0: i32, %arg1: memref<1x128xf32, #tpu.memory_space<vmem>>, %arg2: memref<1x96xf32, #tpu.memory_space<vmem>>, %arg3: memref<1x96xf32, #tpu.memory_space<vmem>>, %arg4: memref<1x128x96xf32, #tpu.memory_space<vmem>>) attributes {dimension_semantics = [#tpu.dimension_semantics<parallel>], iteration_bounds = array<i64: 1>, scalar_prefetch = 0 : i64, scratch_operands = 0 : i64, tpu.core_type = #tpu.core_type<tc>, window_params = [{transform_indices = @transform_0, window_bounds = array<i64: 1, 128>}, {pipeline_mode = #tpu.pipeline_mode<synchronous>, transform_indices = @transform_1, window_bounds = array<i64: 1, 96>}, {pipeline_mode = #tpu.pipeline_mode<synchronous>, transform_indices = @transform_2, window_bounds = array<i64: 1, 96>}, {transform_indices = @transform_3, window_bounds = array<i64: 1, 128, 96>}]} {
    %c0 = arith.constant 0 : index
    %c0_0 = arith.constant 0 : index
    %0 = vector.load %arg1[%c0, %c0_0] : memref<1x128xf32, #tpu.memory_space<vmem>>, vector<1x128xf32>
    %c0_1 = arith.constant 0 : index
    %c0_2 = arith.constant 0 : index
    %1 = vector.load %arg2[%c0_1, %c0_2] : memref<1x96xf32, #tpu.memory_space<vmem>>, vector<1x96xf32>
    %c0_3 = arith.constant 0 : index
    %c0_4 = arith.constant 0 : index
    %2 = vector.load %arg3[%c0_3, %c0_4] : memref<1x96xf32, #tpu.memory_space<vmem>>, vector<1x96xf32>
    %3 = vector.shape_cast %0 : vector<1x128xf32> to vector<1x128x1xf32>
    %4 = vector.shape_cast %1 : vector<1x96xf32> to vector<1x1x96xf32>
    %5 = vector.broadcast %3 : vector<1x128x1xf32> to vector<1x128x96xf32>
    %6 = vector.broadcast %4 : vector<1x1x96xf32> to vector<1x128x96xf32>
    %7 = arith.mulf %5, %6 : vector<1x128x96xf32>
    %8 = vector.shape_cast %2 : vector<1x96xf32> to vector<1x1x96xf32>
    %9 = vector.broadcast %8 : vector<1x1x96xf32> to vector<1x128x96xf32>
    %10 = arith.addf %7, %9 : vector<1x128x96xf32>
    %c0_5 = arith.constant 0 : index
    %c0_6 = arith.constant 0 : index
    %c0_7 = arith.constant 0 : index
    %11 = vector.load %arg4[%c0_5, %c0_6, %c0_7] : memref<1x128x96xf32, #tpu.memory_space<vmem>>, vector<1x128x96xf32>
    tpu.vector_store %arg4[%c0_5, %c0_6, %c0_7], %10 {strides = array<i32>} : memref<1x128x96xf32, #tpu.memory_space<vmem>>, vector<1x128x96xf32>,
    return
  }
  func.func @transform_0(%arg0: i32) -> (i32, i32) {
    %c0_i32 = arith.constant 0 : i32
    %c0_i32_0 = arith.constant 0 : i32
    return %arg0, %c0_i32 : i32, i32
  }
  func.func @transform_1(%arg0: i32) -> (i32, i32) {
    %c0_i32 = arith.constant 0 : i32
    %c0_i32_0 = arith.constant 0 : i32
    %c0_i32_1 = arith.constant 0 : i32
    return %c0_i32, %c0_i32_0 : i32, i32
  }
  func.func @transform_2(%arg0: i32) -> (i32, i32) {
    %c0_i32 = arith.constant 0 : i32
    %c0_i32_0 = arith.constant 0 : i32
    %c0_i32_1 = arith.constant 0 : i32
    return %c0_i32, %c0_i32_0 : i32, i32
  }
  func.func @transform_3(%arg0: i32) -> (i32, i32, i32) {
    %c0_i32 = arith.constant 0 : i32
    %c0_i32_0 = arith.constant 0 : i32
    %c0_i32_1 = arith.constant 0 : i32
    return %arg0, %c0_i32, %c0_i32_0 : i32, i32, i32
  }
}

</mosaic_0001>

<llo_original>
// kernel: category_layer_forward.1
$region0: #{category_layer_forward.1}
  #allocation0 [shape = 'u32[]', space=smem, size = 0x4, offset = 0x4, fixed_abs, tag = 'smem constant byte address 0x4 - core index']
  #allocation1 [shape = 'u32[144,128]{1,0:T(1,128)}', space=vmem, size = 0x12000, scoped, tag = 'internal scratch']
  %s0 = inlined_call_operand.vmem [shape: f32[1,128], index: 0, kind: input, shape index: {}]
  %s1 = inlined_call_operand.vmem [shape: f32[1,96], index: 1, kind: input, shape index: {}]
  %s2 = inlined_call_operand.vmem [shape: f32[1,96], index: 2, kind: input, shape index: {}]
  %s3 = inlined_call_operand.vmem [shape: f32[1,128,96], index: 3, kind: output, shape index: {}]
  %s4 = sld [smem:[#allocation0]]
  $region22: #{category_layer_forward.1} parent=0
    _
  %s6 = ssub.s32 1, %s4
  %s7 = scalar_select 0, %s6, %s4
  // Predicated region
  $region2: #{category_layer_forward.1} parent=0 // pred_check
    _
  $region3: #{category_layer_forward.1} parent=0 // pred_check_branch
    %9 = sbr.rel (0) target = $region5
  $region4: #{category_layer_forward.1} parent=0 // pred_region
    _
  $region5: #{category_layer_forward.1} parent=0 // pred_fallthru
    _
  // Predicated region
  $region6: #{category_layer_forward.1} parent=0 // pred_check
    _
  $region7: #{category_layer_forward.1} parent=0 // pred_check_branch
    %11 = sbr.rel (0) target = $region9
  $region8: #{category_layer_forward.1} parent=0 // pred_region
    _
  $region9: #{category_layer_forward.1} parent=0 // pred_fallthru
    _
  // Predicated region
  $region10: #{category_layer_forward.1} parent=0 // pred_check
    _
  $region11: #{category_layer_forward.1} parent=0 // pred_check_branch
    %13 = sbr.rel (0) target = $region13
  $region12: #{category_layer_forward.1} parent=0 // pred_region
    _
  $region13: #{category_layer_forward.1} parent=0 // pred_fallthru
    _
  %v14 = vld [vmem:[%s0] sm:$0x1]
  %v15 = vld [vmem:[%s1] sm:$0x1]
  %v16 = vld [vmem:[%s2] sm:$0x1]
  %v17 = vlaneseq
  %v18 = vshrl.u32 %v17, 7
  %v19 = vsub.s32 0, %v18
  %v20 = vrot.slane %v14, %v19
  %22 = vbcast.lane.b32.xlu0 %v20, 256
  %v23 = vpop.permute.xlu0 %22
  %s25 = sor.u32 256, 8
  %26 = vbcast.lane.b32.xlu0 %v20, %s25
  %v27 = vpop.permute.xlu0 %26
  %s29 = sor.u32 256, 16
  %30 = vbcast.lane.b32.xlu0 %v20, %s29
  %v31 = vpop.permute.xlu0 %30
  %s33 = sor.u32 256, 24
  %34 = vbcast.lane.b32.xlu0 %v20, %s33
  %v35 = vpop.permute.xlu0 %34
  %s37 = sor.u32 256, 32
  %38 = vbcast.lane.b32.xlu0 %v20, %s37
  %v39 = vpop.permute.xlu0 %38
  %s41 = sor.u32 256, 40
  %42 = vbcast.lane.b32.xlu0 %v20, %s41
  %v43 = vpop.permute.xlu0 %42
  %s45 = sor.u32 256, 48
  %46 = vbcast.lane.b32.xlu0 %v20, %s45
  %v47 = vpop.permute.xlu0 %46
  %s49 = sor.u32 256, 56
  %50 = vbcast.lane.b32.xlu0 %v20, %s49
  %v51 = vpop.permute.xlu0 %50
  %s53 = sor.u32 256, 64
  %54 = vbcast.lane.b32.xlu0 %v20, %s53
  %v55 = vpop.permute.xlu0 %54
  %s57 = sor.u32 256, 72
  %58 = vbcast.lane.b32.xlu0 %v20, %s57
  %v59 = vpop.permute.xlu0 %58
  %s61 = sor.u32 256, 80
  %62 = vbcast.lane.b32.xlu0 %v20, %s61
  %v63 = vpop.permute.xlu0 %62
  %s65 = sor.u32 256, 88
  %66 = vbcast.lane.b32.xlu0 %v20, %s65
  %v67 = vpop.permute.xlu0 %66
  %s69 = sor.u32 256, 96
  %70 = vbcast.lane.b32.xlu0 %v20, %s69
  %v71 = vpop.permute.xlu0 %70
  %s73 = sor.u32 256, 104
  %74 = vbcast.lane.b32.xlu0 %v20, %s73
  %v75 = vpop.permute.xlu0 %74
  %s77 = sor.u32 256, 112
  %78 = vbcast.lane.b32.xlu0 %v20, %s77
  %v79 = vpop.permute.xlu0 %78
  %s81 = sor.u32 256, 120
  %82 = vbcast.lane.b32.xlu0 %v20, %s81
  %v83 = vpop.permute.xlu0 %82
  %v85 = vlaneseq
  %v86 = vshrl.u32 %v85, 7
  %v87 = vsub.s32 0, %v86
  %v88 = vrot.slane %v15, %v87
  %v90 = vmul.f32 %v23, %v88
  %v91 = vmul.f32 %v27, %v88
  %v92 = vmul.f32 %v31, %v88
  %v93 = vmul.f32 %v35, %v88
  %v94 = vmul.f32 %v39, %v88
  %v95 = vmul.f32 %v43, %v88
  %v96 = vmul.f32 %v47, %v88
  %v97 = vmul.f32 %v51, %v88
  %v98 = vmul.f32 %v55, %v88
  %v99 = vmul.f32 %v59, %v88
  %v100 = vmul.f32 %v63, %v88
  %v101 = vmul.f32 %v67, %v88
  %v102 = vmul.f32 %v71, %v88
  %v103 = vmul.f32 %v75, %v88
  %v104 = vmul.f32 %v79, %v88
  %v105 = vmul.f32 %v83, %v88
  %v107 = vlaneseq
  %v108 = vshrl.u32 %v107, 7
  %v109 = vsub.s32 0, %v108
  %v110 = vrot.slane %v16, %v109
  %v112 = vadd.f32 %v90, %v110
  %v113 = vadd.f32 %v91, %v110
  %v114 = vadd.f32 %v92, %v110
  %v115 = vadd.f32 %v93, %v110
  %v116 = vadd.f32 %v94, %v110
  %v117 = vadd.f32 %v95, %v110
  %v118 = vadd.f32 %v96, %v110
  %v119 = vadd.f32 %v97, %v110
  %v120 = vadd.f32 %v98, %v110
  %v121 = vadd.f32 %v99, %v110
  %v122 = vadd.f32 %v100, %v110
  %v123 = vadd.f32 %v101, %v110
  %v124 = vadd.f32 %v102, %v110
  %v125 = vadd.f32 %v103, %v110
  %v126 = vadd.f32 %v104, %v110
  %v127 = vadd.f32 %v105, %v110
  %vm128 = vcmask 785408
  %129 = vst.msk [vmem:[%s3] sm:$0xff] %vm128, %v112
  %130 = vst.msk [vmem:[%s3 + $0x8] sm:$0xff] %vm128, %v113
  %131 = vst.msk [vmem:[%s3 + $0x10] sm:$0xff] %vm128, %v114
  %132 = vst.msk [vmem:[%s3 + $0x18] sm:$0xff] %vm128, %v115
  %133 = vst.msk [vmem:[%s3 + $0x20] sm:$0xff] %vm128, %v116
  %134 = vst.msk [vmem:[%s3 + $0x28] sm:$0xff] %vm128, %v117
  %135 = vst.msk [vmem:[%s3 + $0x30] sm:$0xff] %vm128, %v118
  %136 = vst.msk [vmem:[%s3 + $0x38] sm:$0xff] %vm128, %v119
  %137 = vst.msk [vmem:[%s3 + $0x40] sm:$0xff] %vm128, %v120
  %138 = vst.msk [vmem:[%s3 + $0x48] sm:$0xff] %vm128, %v121
  %139 = vst.msk [vmem:[%s3 + $0x50] sm:$0xff] %vm128, %v122
  %140 = vst.msk [vmem:[%s3 + $0x58] sm:$0xff] %vm128, %v123
  %141 = vst.msk [vmem:[%s3 + $0x60] sm:$0xff] %vm128, %v124
  %142 = vst.msk [vmem:[%s3 + $0x68] sm:$0xff] %vm128, %v125
  %143 = vst.msk [vmem:[%s3 + $0x70] sm:$0xff] %vm128, %v126
  %144 = vst.msk [vmem:[%s3 + $0x78] sm:$0xff] %vm128, %v127
  // Predicated region
  $region14: #{category_layer_forward.1} parent=0 // pred_check
    _
  $region15: #{category_layer_forward.1} parent=0 // pred_check_branch
    %146 = sbr.rel (0) target = $region17
  $region16: #{category_layer_forward.1} parent=0 // pred_region
    _
  $region17: #{category_layer_forward.1} parent=0 // pred_fallthru
    _
  // Predicated region
  $region18: #{category_layer_forward.1} parent=0 // pred_check
    _
  $region19: #{category_layer_forward.1} parent=0 // pred_check_branch
    %148 = sbr.rel (0) target = $region21
  $region20: #{category_layer_forward.1} parent=0 // pred_region
    _
  $region21: #{category_layer_forward.1} parent=0 // pred_fallthru
    _

</llo_original>
